<compile_context>
chip_gen: v5e
topology: v5e:2x2
jax: 0.10.0
libtpu: 0.0.40
codegen_flags: <defaults>
</compile_context>

<pallas_src>
import functools

import jax
import jax.numpy as jnp
import numpy as np
from jax import lax
from jax.experimental import pallas as pl
from jax.experimental.pallas import tpu as pltpu

# ---- model hyperparameters (match the PyTorch module defaults) -------------
VOCAB_SIZE = 50
VOCAB_PAD = 64                        # embedding rows padded for clean layout
EMBED_DIM = 128
NUM_FILTERS = 64                      # Conv1d out_channels
KERNEL_SIZES = (2, 3, 4)
MAX_K = max(KERNEL_SIZES)
NUM_CLASSES = 2
FEAT_DIM = NUM_FILTERS * len(KERNEL_SIZES)          # 192
OUT_PAD = 4 * NUM_FILTERS                           # 256 = 2 full lane vregs
CLS_PAD = 128                                       # lane-dense classifier out
FUSED_K = MAX_K * VOCAB_PAD                         # 256 contraction width

# MXU operand dtype for the fused gather+conv matmul.  bf16 is the native MXU
# path on v6e/v7x (and valid on v5e); jnp.float32 gives exact parity with the
# f32 reference at 1e-5.
MXU_DTYPE = jnp.bfloat16

# TODO(synk): nn.Dropout(0.5) is identity at inference time; training-mode
# stochastic dropout is not implemented in the kernel.


def cnn_text_kernel(ids_ref, wfused_ref, bconv_ref, mask_ref, wfc_ref, bfc_ref,
                    out_ref, *, batch, seq_len):
    """Fused one-hot gather+Conv1d(k=2,3,4) + ReLU + mask + max-pool + Linear.

    ids_ref    : (BLP, 4) int32   -- tap-shifted flattened token ids
                                     (column j holds id at flat position r+j)
    wfused_ref : (256, 256)       -- table @ conv-weights, tap-blocked rows,
                                     branch-blocked (and zero-padded) columns
    bconv_ref  : (1, 256) f32     -- conv biases, branch-blocked & padded
    mask_ref   : (L, 256) f32     -- 0/1 time-validity mask per branch block
    wfc_ref    : (256, 128) f32   -- classifier weight, padded rows/cols zero
    bfc_ref    : (1, 128) f32
    out_ref    : (B, 128) f32     -- lane-dense logits; wrapper slices [:, :C]
    """
    B, L = batch, seq_len
    BL = B * L
    BLP = ids_ref.shape[0]

    # ---- one-hot LHS: 4 lane-concatenated (BLP, 64) blocks, one per tap -----
    vocab_iota = lax.broadcasted_iota(jnp.int32, (BLP, VOCAB_PAD), 1)
    onehot = jnp.concatenate(
        [(ids_ref[:, j:j + 1] == vocab_iota).astype(MXU_DTYPE)
         for j in range(MAX_K)],
        axis=1)                                                    # (BLP, 256)

    # ---- single fused gather+conv matmul (all taps, all branches) -----------
    conv = jnp.dot(onehot, wfused_ref[...],
                   preferred_element_type=jnp.float32)             # (BLP, 256)
    act = jnp.maximum(conv + bconv_ref[...], 0.0)

    # INVARIANT (cross-batch / pad tap bleed): for rows near the end of each
    # sequence, taps j >= 1 one-hot the NEXT batch element's (or zero-pad) ids.
    # This is correct ONLY because those time positions are zeroed by the mask
    # below before the max-pool and the ReLU output is >= 0, so a masked 0
    # never wins the max.  Do not change the activation / pooling / mask value
    # without revisiting this.
    if BLP != BL:
        act = act[:BL]
    act = act.reshape(B, L, OUT_PAD) * mask_ref[...]               # (B, L, 256)

    # ---- global max-pool over time, all branches at once --------------------
    pooled = jnp.max(act, axis=1)                                  # (B, 256)

    # ---- single classifier matmul + single lane-dense (B, 128) store --------
    out_ref[...] = (jnp.dot(pooled, wfc_ref[...],
                            preferred_element_type=jnp.float32)
                    + bfc_ref[...]).astype(out_ref.dtype)


def init_params(key):
    """Deterministic synthetic parameters (shapes from the module __init__)."""
    keys = jax.random.split(key, 9)
    emb_table = 0.02 * jax.random.normal(keys[0], (VOCAB_SIZE, EMBED_DIM),
                                         jnp.float32)
    emb_table = emb_table.at[0].set(0.0)    # padding_idx=0 -> zero row

    conv_w, conv_b = [], []
    for i, k in enumerate(KERNEL_SIZES):
        # PyTorch Conv1d weight is (64, D, k); we store tap-major transposed:
        # w[j] = W_pt[:, :, j].T with shape (D, 64).  (Importing real PyTorch
        # weights requires that explicit transpose.)
        w = 0.05 * jax.random.normal(keys[1 + i], (k, EMBED_DIM, NUM_FILTERS),
                                     jnp.float32)
        b = 0.01 * jax.random.normal(keys[4 + i], (1, NUM_FILTERS), jnp.float32)
        conv_w.append(w)
        conv_b.append(b)

    # PyTorch Linear weight is (C, 64*3); we store its transpose (64*3, C).
    fc_w = 0.05 * jax.random.normal(keys[7], (FEAT_DIM, NUM_CLASSES),
                                    jnp.float32)
    fc_b = 0.01 * jax.random.normal(keys[8], (1, NUM_CLASSES), jnp.float32)
    return dict(embedding=emb_table, conv_w=conv_w, conv_b=conv_b,
                fc_w=fc_w, fc_b=fc_b)


def pack_kernel_params(params, seq_len):
    """Pack module parameters into the fused, lane-aligned kernel layout."""
    # Conv weights laid out tap-blocked rows x branch-blocked columns.
    wconv = jnp.zeros((MAX_K * EMBED_DIM, OUT_PAD), jnp.float32)
    bconv = jnp.zeros((1, OUT_PAD), jnp.float32)
    for i, k in enumerate(KERNEL_SIZES):
        w = params["conv_w"][i]                       # (k, D, 64) tap-major
        for j in range(k):
            wconv = wconv.at[j * EMBED_DIM:(j + 1) * EMBED_DIM,
                             i * NUM_FILTERS:(i + 1) * NUM_FILTERS].set(w[j])
        bconv = bconv.at[:, i * NUM_FILTERS:(i + 1) * NUM_FILTERS].set(
            params["conv_b"][i])

    # Embedding table padded to 64 rows (pad rows zero, never selected), then
    # pre-multiplied into every tap block IN f32 so the kernel's single
    # (BL, 256) @ (256, 256) matmul does gather + all taps + all branches at
    # once.  Taps j >= k_i and the 4th (pad) column block stay zero.
    table = jnp.zeros((VOCAB_PAD, EMBED_DIM), jnp.float32)
    table = table.at[:VOCAB_SIZE].set(params["embedding"])
    wfused = jnp.zeros((FUSED_K, OUT_PAD), jnp.float32)
    for j in range(MAX_K):
        wfused = wfused.at[j * VOCAB_PAD:(j + 1) * VOCAB_PAD, :].set(
            table @ wconv[j * EMBED_DIM:(j + 1) * EMBED_DIM, :])

    # Precomputed time-validity mask: position t is valid for branch i iff
    # t <= L - k_i, i.e. the conv window fits.  Pad columns stay 0 (their
    # weights/bias are zero anyway).
    mask = np.zeros((seq_len, OUT_PAD), np.float32)
    for i, k in enumerate(KERNEL_SIZES):
        mask[:seq_len - k + 1, i * NUM_FILTERS:(i + 1) * NUM_FILTERS] = 1.0

    # Classifier padded lane-dense: (192, 2) -> (256, 128); pad rows/cols zero.
    wfc = jnp.zeros((OUT_PAD, CLS_PAD), jnp.float32)
    wfc = wfc.at[:FEAT_DIM, :NUM_CLASSES].set(params["fc_w"])
    bfc = jnp.zeros((1, CLS_PAD), jnp.float32)
    bfc = bfc.at[:, :NUM_CLASSES].set(params["fc_b"])

    return dict(wfused=wfused.astype(MXU_DTYPE), bconv=bconv,
                mask=jnp.asarray(mask), wfc=wfc, bfc=bfc)


def cnn_text_classifier(token_ids, packed):
    B, L = token_ids.shape
    assert L >= MAX_K, f"seq_len {L} must be >= max kernel size {MAX_K}"
    BL = B * L
    BLP = ((BL + 7) // 8) * 8        # sublane-align the row count

    # Tap-shifted id columns: ids_tap[r, j] = flat id at position r + j, with
    # padding-token (0) fill past the end.  The kernel one-hots each column.
    ids_flat = token_ids.reshape(BL).astype(jnp.int32)
    ids_pad = jnp.concatenate(
        [ids_flat, jnp.zeros((BLP - BL + MAX_K - 1,), jnp.int32)])
    ids_tap = jnp.stack([ids_pad[j:j + BLP] for j in range(MAX_K)], axis=1)

    vmem = pl.BlockSpec(memory_space=pltpu.MemorySpace.VMEM)
    out = pl.pallas_call(
        functools.partial(cnn_text_kernel, batch=B, seq_len=L),
        out_shape=jax.ShapeDtypeStruct((B, CLS_PAD), jnp.float32),
        in_specs=[vmem] * 6,
        out_specs=vmem,
    )(ids_tap, packed["wfused"], packed["bconv"], packed["mask"],
      packed["wfc"], packed["bfc"])
    return out[:, :NUM_CLASSES]
    # TODO(synk): for large B, add grid=(BL // block_rows,) with per-block
    # BlockSpecs on ids/mask/out, constant index_maps on the weights, and
    # dimension_semantics=("parallel",) to use both v7x TensorCores; size
    # block_rows against v5e's 16 MiB scoped-VMEM default and v7x's 64 MiB
    # physical VMEM (not v6e's 128 MiB).  At B=2 a gridless program is optimal.


def reference_forward(token_ids, params):
    """Pure-JAX f32 reference matching the PyTorch forward semantics."""
    emb = jnp.take(params["embedding"], token_ids, axis=0)      # (B, L, D)
    B, L, _ = emb.shape
    pooled = []
    for i, k in enumerate(KERNEL_SIZES):
        w, b = params["conv_w"][i], params["conv_b"][i]
        T = L - k + 1
        conv = b.reshape(1, 1, NUM_FILTERS)
        for j in range(k):
            conv = conv + jnp.einsum("bld,do->blo", emb[:, j:j + T, :], w[j])
        act = jnp.maximum(conv, 0.0)                            # (B, T, 64)
        pooled.append(jnp.max(act, axis=1))                     # (B, 64)
    feat = jnp.concatenate(pooled, axis=1)                      # (B, 192)
    return feat @ params["fc_w"] + params["fc_b"]               # (B, C)


if __name__ == "__main__":
    key = jax.random.PRNGKey(0)
    k_tok, k_par = jax.random.split(key)

    B, L = 2, 8
    token_ids = jax.random.randint(k_tok, (B, L), minval=0, maxval=VOCAB_SIZE,
                                   dtype=jnp.int32)
    token_ids = token_ids.at[0, -2:].set(0)   # include some padding tokens
    params = init_params(k_par)
    packed = pack_kernel_params(params, seq_len=L)

    out = jax.block_until_ready(cnn_text_classifier(token_ids, packed))
    ref = jax.block_until_ready(reference_forward(token_ids, params))

    if MXU_DTYPE == jnp.float32:
        rtol, atol = 1e-5, 1e-5           # exact f32 parity path
    else:
        rtol, atol = 2e-2, 2e-3           # bf16 MXU operands (weights rounded)
    np.testing.assert_allclose(np.asarray(out), np.asarray(ref),
                               rtol=rtol, atol=atol)
    print("KERNEL_OK")
</pallas_src>

<mosaic_0001>
module attributes {stable_mosaic.version = 11 : i64} {
  func.func @cnn_text_kernel(%arg0: memref<16x4xi32, #tpu.memory_space<vmem>>, %arg1: memref<256x256xbf16, #tpu.memory_space<vmem>>, %arg2: memref<1x256xf32, #tpu.memory_space<vmem>>, %arg3: memref<8x256xf32, #tpu.memory_space<vmem>>, %arg4: memref<256x128xf32, #tpu.memory_space<vmem>>, %arg5: memref<1x128xf32, #tpu.memory_space<vmem>>, %arg6: memref<2x128xf32, #tpu.memory_space<vmem>>) attributes {dimension_semantics = [], scalar_prefetch = 0 : i64, scratch_operands = 0 : i64, tpu.core_type = #tpu.core_type<tc>} {
    %0 = tpu.iota {dimensions = array<i32: 1>} : vector<16x64xi32>
    %c0 = arith.constant 0 : index
    %c0_0 = arith.constant 0 : index
    %1 = vector.load %arg0[%c0, %c0_0] : memref<16x4xi32, #tpu.memory_space<vmem>>, vector<16x1xi32>
    %2 = vector.broadcast %1 : vector<16x1xi32> to vector<16x64xi32>
    %3 = arith.cmpi eq, %2, %0 : vector<16x64xi32>
    %4 = arith.extui %3 : vector<16x64xi1> to vector<16x64xi32>
    %5 = arith.sitofp %4 : vector<16x64xi32> to vector<16x64xf32>
    %6 = arith.truncf %5 : vector<16x64xf32> to vector<16x64xbf16>
    %c0_1 = arith.constant 0 : index
    %c1 = arith.constant 1 : index
    %7 = vector.load %arg0[%c0_1, %c1] : memref<16x4xi32, #tpu.memory_space<vmem>>, vector<16x1xi32>
    %8 = vector.broadcast %7 : vector<16x1xi32> to vector<16x64xi32>
    %9 = arith.cmpi eq, %8, %0 : vector<16x64xi32>
    %10 = arith.extui %9 : vector<16x64xi1> to vector<16x64xi32>
    %11 = arith.sitofp %10 : vector<16x64xi32> to vector<16x64xf32>
    %12 = arith.truncf %11 : vector<16x64xf32> to vector<16x64xbf16>
    %c0_2 = arith.constant 0 : index
    %c2 = arith.constant 2 : index
    %13 = vector.load %arg0[%c0_2, %c2] : memref<16x4xi32, #tpu.memory_space<vmem>>, vector<16x1xi32>
    %14 = vector.broadcast %13 : vector<16x1xi32> to vector<16x64xi32>
    %15 = arith.cmpi eq, %14, %0 : vector<16x64xi32>
    %16 = arith.extui %15 : vector<16x64xi1> to vector<16x64xi32>
    %17 = arith.sitofp %16 : vector<16x64xi32> to vector<16x64xf32>
    %18 = arith.truncf %17 : vector<16x64xf32> to vector<16x64xbf16>
    %c0_3 = arith.constant 0 : index
    %c3 = arith.constant 3 : index
    %19 = vector.load %arg0[%c0_3, %c3] : memref<16x4xi32, #tpu.memory_space<vmem>>, vector<16x1xi32>
    %20 = vector.broadcast %19 : vector<16x1xi32> to vector<16x64xi32>
    %21 = arith.cmpi eq, %20, %0 : vector<16x64xi32>
    %22 = arith.extui %21 : vector<16x64xi1> to vector<16x64xi32>
    %23 = arith.sitofp %22 : vector<16x64xi32> to vector<16x64xf32>
    %24 = arith.truncf %23 : vector<16x64xf32> to vector<16x64xbf16>
    %25 = tpu.concatenate %6, %12, %18, %24 in 1 : vector<16x64xbf16>, vector<16x64xbf16>, vector<16x64xbf16>, vector<16x64xbf16> -> vector<16x256xbf16>
    %c0_4 = arith.constant 0 : index
    %c0_5 = arith.constant 0 : index
    %26 = vector.load %arg1[%c0_4, %c0_5] : memref<256x256xbf16, #tpu.memory_space<vmem>>, vector<256x256xbf16>
    %cst = arith.constant dense<0.000000e+00> : vector<16x256xf32>
    %27 = tpu.matmul %25, %26, %cst {dimension_numbers = #tpu.dot_dimension_numbers<[1], [0], [0], [1], [0, 0, 1, 1], [], []>} : vector<16x256xbf16>, vector<256x256xbf16>, vector<16x256xf32> -> vector<16x256xf32>
    %c0_6 = arith.constant 0 : index
    %c0_7 = arith.constant 0 : index
    %28 = vector.load %arg2[%c0_6, %c0_7] : memref<1x256xf32, #tpu.memory_space<vmem>>, vector<1x256xf32>
    %29 = vector.broadcast %28 : vector<1x256xf32> to vector<16x256xf32>
    %30 = arith.addf %27, %29 : vector<16x256xf32>
    %cst_8 = arith.constant 0.000000e+00 : f32
    %31 = vector.broadcast %cst_8 : f32 to vector<16x256xf32>
    %32 = arith.maximumf %30, %31 : vector<16x256xf32>
    %33 = vector.shape_cast %32 : vector<16x256xf32> to vector<2x8x256xf32>
    %c0_9 = arith.constant 0 : index
    %c0_10 = arith.constant 0 : index
    %34 = vector.load %arg3[%c0_9, %c0_10] : memref<8x256xf32, #tpu.memory_space<vmem>>, vector<8x256xf32>
    %35 = vector.shape_cast %34 : vector<8x256xf32> to vector<1x8x256xf32>
    %36 = vector.broadcast %35 : vector<1x8x256xf32> to vector<2x8x256xf32>
    %37 = arith.mulf %33, %36 : vector<2x8x256xf32>
    %cst_11 = arith.constant dense<0xFF800000> : vector<2x256xf32>
    %38 = vector.multi_reduction <maximumf>, %37, %cst_11 [1] : vector<2x8x256xf32> to vector<2x256xf32>
    %c0_12 = arith.constant 0 : index
    %c0_13 = arith.constant 0 : index
    %39 = vector.load %arg4[%c0_12, %c0_13] : memref<256x128xf32, #tpu.memory_space<vmem>>, vector<256x128xf32>
    %cst_14 = arith.constant dense<0.000000e+00> : vector<2x128xf32>
    %40 = tpu.matmul %38, %39, %cst_14 {dimension_numbers = #tpu.dot_dimension_numbers<[1], [0], [0], [1], [0, 0, 1, 1], [], []>} : vector<2x256xf32>, vector<256x128xf32>, vector<2x128xf32> -> vector<2x128xf32>
    %c0_15 = arith.constant 0 : index
    %c0_16 = arith.constant 0 : index
    %41 = vector.load %arg5[%c0_15, %c0_16] : memref<1x128xf32, #tpu.memory_space<vmem>>, vector<1x128xf32>
    %42 = vector.broadcast %41 : vector<1x128xf32> to vector<2x128xf32>
    %43 = arith.addf %40, %42 : vector<2x128xf32>
    %c0_17 = arith.constant 0 : index
    %c0_18 = arith.constant 0 : index
    %44 = vector.load %arg6[%c0_17, %c0_18] : memref<2x128xf32, #tpu.memory_space<vmem>>, vector<2x128xf32>
    tpu.vector_store %arg6[%c0_17, %c0_18], %43 {strides = array<i32>} : memref<2x128xf32, #tpu.memory_space<vmem>>, vector<2x128xf32>,
    return
  }
}

</mosaic_0001>

<llo_original>
// kernel: tpu_custom_call.1
$region0: #{tpu_custom_call.1}
  #allocation0 [shape = 'u32[]', space=smem, size = 0x4, offset = 0x4, fixed_abs, tag = 'smem constant byte address 0x4 - core index']
  #allocation1 [shape = 'u32[72,128]{1,0:T(1,128)}', space=vmem, size = 0x9000, scoped, tag = 'internal scratch']
  %s0 = inlined_call_operand.vmem [shape: s32[16,4], index: 0, kind: input, shape index: {}]
  %s1 = inlined_call_operand.hbm [shape: bf16[256,256], index: 1, kind: input, shape index: {}]
  %s2 = inlined_call_operand.vmem [shape: f32[1,256], index: 2, kind: input, shape index: {}]
  %s3 = inlined_call_operand.vmem [shape: f32[8,256], index: 3, kind: input, shape index: {}]
  %s4 = inlined_call_operand.hbm [shape: f32[256,128], index: 4, kind: input, shape index: {}]
  %s5 = inlined_call_operand.vmem [shape: f32[1,128], index: 5, kind: input, shape index: {}]
  %s6 = inlined_call_operand.hbm [shape: f32[2,128], index: 6, kind: output, shape index: {}]
  %s7 = sld [smem:[#allocation0]]
  $region42: #{tpu_custom_call.1} parent=0
    _
  %s9 = ssub.s32 1, %s7
  %s10 = scalar_select 0, %s9, %s7
  $region1: #{tpu_custom_call.1} parent=0
    #allocation2 [shape = 'u8[131072]{0}', space=vmem, size = 0x20000, scoped, tag = 'input window, operand 1, single buffered']
    #allocation3 [shape = 's32[1]{0}', space=sflag, size = 0x4, scoped, tag = 'scoped memory for tpu_custom_call.1']
    #allocation4 [shape = 's32[1]{0}', space=sflag, size = 0x4, scoped, tag = 'scoped memory for tpu_custom_call.1']
    #allocation5 [shape = 'u8[131072]{0}', space=vmem, size = 0x20000, scoped, tag = 'input window, operand 4, single buffered']
    #allocation6 [shape = 's32[1]{0}', space=sflag, size = 0x4, scoped, tag = 'scoped memory for tpu_custom_call.1']
    #allocation7 [shape = 'u8[1024]{0}', space=vmem, size = 0x400, scoped, tag = 'output window, operand 0, single buffered']
    %11 = vsyncpa [#allocation3], 0
    %12 = vsyncpa [#allocation6], 0
    %13 = vsyncpa [#allocation4], 0
    // Predicated region
    $region2: #{tpu_custom_call.1} parent=1 // pred_check
      _
    $region3: #{tpu_custom_call.1} parent=1 // pred_check_branch
      %15 = sbr.rel (0) target = $region5
    $region4: #{tpu_custom_call.1} parent=1 // pred_region
      _
    $region5: #{tpu_custom_call.1} parent=1 // pred_fallthru
      _
    // Predicated region
    $region6: #{tpu_custom_call.1} parent=1 // pred_check
      _
    $region7: #{tpu_custom_call.1} parent=1 // pred_check_branch
      %17 = sbr.rel (0) target = $region9
    $region8: #{tpu_custom_call.1} parent=1 // pred_region
      %19 = vsyncadd [#allocation3], 0
      %s20 = sshll.u32 %s1, 4
      %s21 = int_to_ptr.hbm [resolvable:$true] %s20
      %s22 = sshll.u32 [#allocation2], 4
      %s23 = int_to_ptr.vmem [resolvable:$true] %s22
      %28 = dma.hbm_to_vmem [thread:$0]  %s21, 4096, %s23, [#allocation3], 128, 128, 8
    $region9: #{tpu_custom_call.1} parent=1 // pred_fallthru
      _
    // Predicated region
    $region10: #{tpu_custom_call.1} parent=1 // pred_check
      _
    $region11: #{tpu_custom_call.1} parent=1 // pred_check_branch
      %30 = sbr.rel (0) target = $region13
    $region12: #{tpu_custom_call.1} parent=1 // pred_region
      _
    $region13: #{tpu_custom_call.1} parent=1 // pred_fallthru
      _
    // Predicated region
    $region14: #{tpu_custom_call.1} parent=1 // pred_check
      _
    $region15: #{tpu_custom_call.1} parent=1 // pred_check_branch
      %32 = sbr.rel (0) target = $region17
    $region16: #{tpu_custom_call.1} parent=1 // pred_region
      _
    $region17: #{tpu_custom_call.1} parent=1 // pred_fallthru
      _
    // Predicated region
    $region18: #{tpu_custom_call.1} parent=1 // pred_check
      _
    $region19: #{tpu_custom_call.1} parent=1 // pred_check_branch
      %34 = sbr.rel (0) target = $region21
    $region20: #{tpu_custom_call.1} parent=1 // pred_region
      %36 = vsyncadd [#allocation6], 0
      %s37 = sshll.u32 %s4, 4
      %s38 = int_to_ptr.hbm [resolvable:$true] %s37
      %s39 = sshll.u32 [#allocation5], 4
      %s40 = int_to_ptr.vmem [resolvable:$true] %s39
      %45 = dma.hbm_to_vmem [thread:$0]  %s38, 4096, %s40, [#allocation6], 128, 128, 8
    $region21: #{tpu_custom_call.1} parent=1 // pred_fallthru
      _
    // Predicated region
    $region22: #{tpu_custom_call.1} parent=1 // pred_check
      _
    $region23: #{tpu_custom_call.1} parent=1 // pred_check_branch
      %47 = sbr.rel (0) target = $region25
    $region24: #{tpu_custom_call.1} parent=1 // pred_region
      _
    $region25: #{tpu_custom_call.1} parent=1 // pred_fallthru
      _
    // Predicated region
    $region26: #{tpu_custom_call.1} parent=1 // pred_check
      _
    $region27: #{tpu_custom_call.1} parent=1 // pred_check_branch
      %49 = sbr.rel (0) target = $region29
    $region28: #{tpu_custom_call.1} parent=1 // pred_region
      %51 = dma.done [#allocation3], 4096
    $region29: #{tpu_custom_call.1} parent=1 // pred_fallthru
      _
    // Predicated region
    $region30: #{tpu_custom_call.1} parent=1 // pred_check
      _
    $region31: #{tpu_custom_call.1} parent=1 // pred_check_branch
      %53 = sbr.rel (0) target = $region33
    $region32: #{tpu_custom_call.1} parent=1 // pred_region
      %55 = dma.done [#allocation6], 4096
    $region33: #{tpu_custom_call.1} parent=1 // pred_fallthru
      _
    %v56 = vlaneseq
    %v57 = vand.u32 %v56, 127
    %v58 = vld [vmem:[%s0] sm:$0xff]
    %v59 = vld [vmem:[%s0 + $0x8] sm:$0xff]
    %60 = vset.pattern.permute.xlu0 0
    %61 = vperm.xlu0 %60, %v58
    %v62 = vpop.permute.xlu0 %61
    %63 = vset.pattern.permute.xlu0 0
    %64 = vperm.xlu0 %63, %v59
    %v65 = vpop.permute.xlu0 %64
    %vm66 = vcmp.eq.s32.totalorder %v62, %v57
    %vm67 = vcmp.eq.s32.totalorder %v65, %v57
    %v68 = vsel %vm66, 1, 0
    %v69 = vsel %vm67, 1, 0
    %v70 = vcvt.s32.f32 %v68
    %v71 = vcvt.s32.f32 %v69
    %v72 = vpack.c.bf16 %v70, %v70
    %v73 = vpack.c.bf16 %v71, %v71
    %74 = vset.pattern.permute.xlu0 1
    %75 = vperm.xlu0 %74, %v58
    %v76 = vpop.permute.xlu0 %75
    %77 = vset.pattern.permute.xlu0 1
    %78 = vperm.xlu0 %77, %v59
    %v79 = vpop.permute.xlu0 %78
    %vm80 = vcmp.eq.s32.totalorder %v76, %v57
    %vm81 = vcmp.eq.s32.totalorder %v79, %v57
    %v82 = vsel %vm80, 1, 0
    %v83 = vsel %vm81, 1, 0
    %v84 = vcvt.s32.f32 %v82
    %v85 = vcvt.s32.f32 %v83
    %v86 = vpack.c.bf16 %v84, %v84
    %v87 = vpack.c.bf16 %v85, %v85
    %88 = vset.pattern.permute.xlu0 2
    %89 = vperm.xlu0 %88, %v58
    %v90 = vpop.permute.xlu0 %89
    %91 = vset.pattern.permute.xlu0 2
    %92 = vperm.xlu0 %91, %v59
    %v93 = vpop.permute.xlu0 %92
    %vm94 = vcmp.eq.s32.totalorder %v90, %v57
    %vm95 = vcmp.eq.s32.totalorder %v93, %v57
    %v96 = vsel %vm94, 1, 0
    %v97 = vsel %vm95, 1, 0
    %v98 = vcvt.s32.f32 %v96
    %v99 = vcvt.s32.f32 %v97
    %v100 = vpack.c.bf16 %v98, %v98
    %v101 = vpack.c.bf16 %v99, %v99
    %102 = vset.pattern.permute.xlu0 3
    %103 = vperm.xlu0 %102, %v58
    %v104 = vpop.permute.xlu0 %103
    %105 = vset.pattern.permute.xlu0 3
    %106 = vperm.xlu0 %105, %v59
    %v107 = vpop.permute.xlu0 %106
    %vm108 = vcmp.eq.s32.totalorder %v104, %v57
    %vm109 = vcmp.eq.s32.totalorder %v107, %v57
    %v110 = vsel %vm108, 1, 0
    %v111 = vsel %vm109, 1, 0
    %v112 = vcvt.s32.f32 %v110
    %v113 = vcvt.s32.f32 %v111
    %v114 = vpack.c.bf16 %v112, %v112
    %v115 = vpack.c.bf16 %v113, %v113
    %v118 = vunpack.c.l.b16 %v72
    %v119 = vunpack.c.l.b16 %v73
    %v120 = vpack.c.b16 %v119, %v118
    %v123 = vunpack.c.l.b16 %v86
    %v124 = vunpack.c.l.b16 %v87
    %v125 = vpack.c.b16 %v124, %v123
    %126 = vrot.lane.b32.xlu0 %v125, 64
    %v127 = vpop.permute.xlu0 %126
    %v130 = vunpack.c.l.b16 %v100
    %v131 = vunpack.c.l.b16 %v101
    %v132 = vpack.c.b16 %v131, %v130
    %v135 = vunpack.c.l.b16 %v114
    %v136 = vunpack.c.l.b16 %v115
    %v137 = vpack.c.b16 %v136, %v135
    %138 = vrot.lane.b32.xlu0 %v137, 64
    %v139 = vpop.permute.xlu0 %138
    %vm140 = vcmask 523264
    %v143 = vsel %vm140, %v120, %v127
    %v147 = vsel %vm140, %v132, %v139
    %v149 = vld [vmem:[#allocation2] sm:$0xff]
    %v150 = vld [vmem:[#allocation2 + $0x8] sm:$0xff]
    %v151 = vld [vmem:[#allocation2 + $0x10] sm:$0xff]
    %v152 = vld [vmem:[#allocation2 + $0x18] sm:$0xff]
    %v153 = vld [vmem:[#allocation2 + $0x20] sm:$0xff]
    %v154 = vld [vmem:[#allocation2 + $0x28] sm:$0xff]
    %v155 = vld [vmem:[#allocation2 + $0x30] sm:$0xff]
    %v156 = vld [vmem:[#allocation2 + $0x38] sm:$0xff]
    %v157 = vld [vmem:[#allocation2 + $0x40] sm:$0xff]
    %v158 = vld [vmem:[#allocation2 + $0x48] sm:$0xff]
    %v159 = vld [vmem:[#allocation2 + $0x50] sm:$0xff]
    %v160 = vld [vmem:[#allocation2 + $0x58] sm:$0xff]
    %v161 = vld [vmem:[#allocation2 + $0x60] sm:$0xff]
    %v162 = vld [vmem:[#allocation2 + $0x68] sm:$0xff]
    %v163 = vld [vmem:[#allocation2 + $0x70] sm:$0xff]
    %v164 = vld [vmem:[#allocation2 + $0x78] sm:$0xff]
    %v165 = vld [vmem:[#allocation2 + $0x80] sm:$0xff]
    %v166 = vld [vmem:[#allocation2 + $0x88] sm:$0xff]
    %v167 = vld [vmem:[#allocation2 + $0x90] sm:$0xff]
    %v168 = vld [vmem:[#allocation2 + $0x98] sm:$0xff]
    %v169 = vld [vmem:[#allocation2 + $0xa0] sm:$0xff]
    %v170 = vld [vmem:[#allocation2 + $0xa8] sm:$0xff]
    %v171 = vld [vmem:[#allocation2 + $0xb0] sm:$0xff]
    %v172 = vld [vmem:[#allocation2 + $0xb8] sm:$0xff]
    %v173 = vld [vmem:[#allocation2 + $0xc0] sm:$0xff]
    %v174 = vld [vmem:[#allocation2 + $0xc8] sm:$0xff]
    %v175 = vld [vmem:[#allocation2 + $0xd0] sm:$0xff]
    %v176 = vld [vmem:[#allocation2 + $0xd8] sm:$0xff]
    %v177 = vld [vmem:[#allocation2 + $0xe0] sm:$0xff]
    %v178 = vld [vmem:[#allocation2 + $0xe8] sm:$0xff]
    %v179 = vld [vmem:[#allocation2 + $0xf0] sm:$0xff]
    %v180 = vld [vmem:[#allocation2 + $0xf8] sm:$0xff]
    %v181 = vld [vmem:[%s2] sm:$0x3]
    %v183 = vperm.slane %v181, 0
    %v184 = vperm.slane %v181, 1
    %v219 = vunpack.c.l.b16 %v149
    %v220 = vunpack.c.h.b16 %v149
    %v221 = vunpack.c.l.b16 %v150
    %v222 = vunpack.c.h.b16 %v150
    %v223 = vunpack.c.l.b16 %v151
    %v224 = vunpack.c.h.b16 %v151
    %v225 = vunpack.c.l.b16 %v152
    %v226 = vunpack.c.h.b16 %v152
    %v227 = vunpack.c.l.b16 %v153
    %v228 = vunpack.c.h.b16 %v153
    %v229 = vunpack.c.l.b16 %v154
    %v230 = vunpack.c.h.b16 %v154
    %v231 = vunpack.c.l.b16 %v155
    %v232 = vunpack.c.h.b16 %v155
    %v233 = vunpack.c.l.b16 %v156
    %v234 = vunpack.c.h.b16 %v156
    %v235 = vunpack.c.l.b16 %v157
    %v236 = vunpack.c.h.b16 %v157
    %v237 = vunpack.c.l.b16 %v158
    %v238 = vunpack.c.h.b16 %v158
    %v239 = vunpack.c.l.b16 %v159
    %v240 = vunpack.c.h.b16 %v159
    %v241 = vunpack.c.l.b16 %v160
    %v242 = vunpack.c.h.b16 %v160
    %v243 = vunpack.c.l.b16 %v161
    %v244 = vunpack.c.h.b16 %v161
    %v245 = vunpack.c.l.b16 %v162
    %v246 = vunpack.c.h.b16 %v162
    %v247 = vunpack.c.l.b16 %v163
    %v248 = vunpack.c.h.b16 %v163
    %v249 = vunpack.c.l.b16 %v164
    %v250 = vunpack.c.h.b16 %v164
    %v251 = vunpack.c.l.b16 %v165
    %v252 = vunpack.c.h.b16 %v165
    %v253 = vunpack.c.l.b16 %v166
    %v254 = vunpack.c.h.b16 %v166
    %v255 = vunpack.c.l.b16 %v167
    %v256 = vunpack.c.h.b16 %v167
    %v257 = vunpack.c.l.b16 %v168
    %v258 = vunpack.c.h.b16 %v168
    %v259 = vunpack.c.l.b16 %v169
    %v260 = vunpack.c.h.b16 %v169
    %v261 = vunpack.c.l.b16 %v170
    %v262 = vunpack.c.h.b16 %v170
    %v263 = vunpack.c.l.b16 %v171
    %v264 = vunpack.c.h.b16 %v171
    %v265 = vunpack.c.l.b16 %v172
    %v266 = vunpack.c.h.b16 %v172
    %v267 = vunpack.c.l.b16 %v173
    %v268 = vunpack.c.h.b16 %v173
    %v269 = vunpack.c.l.b16 %v174
    %v270 = vunpack.c.h.b16 %v174
    %v271 = vunpack.c.l.b16 %v175
    %v272 = vunpack.c.h.b16 %v175
    %v273 = vunpack.c.l.b16 %v176
    %v274 = vunpack.c.h.b16 %v176
    %v275 = vunpack.c.l.b16 %v177
    %v276 = vunpack.c.h.b16 %v177
    %v277 = vunpack.c.l.b16 %v178
    %v278 = vunpack.c.h.b16 %v178
    %v279 = vunpack.c.l.b16 %v179
    %v280 = vunpack.c.h.b16 %v179
    %v281 = vunpack.c.l.b16 %v180
    %v282 = vunpack.c.h.b16 %v180
    %v283 = vpack.c.b16 %v221, %v219
    %v284 = vpack.c.b16 %v222, %v220
    %v285 = vpack.c.b16 %v225, %v223
    %v286 = vpack.c.b16 %v226, %v224
    %v287 = vpack.c.b16 %v229, %v227
    %v288 = vpack.c.b16 %v230, %v228
    %v289 = vpack.c.b16 %v233, %v231
    %v290 = vpack.c.b16 %v234, %v232
    %v291 = vpack.c.b16 %v237, %v235
    %v292 = vpack.c.b16 %v238, %v236
    %v293 = vpack.c.b16 %v241, %v239
    %v294 = vpack.c.b16 %v242, %v240
    %v295 = vpack.c.b16 %v245, %v243
    %v296 = vpack.c.b16 %v246, %v244
    %v297 = vpack.c.b16 %v249, %v247
    %v298 = vpack.c.b16 %v250, %v248
    %v299 = vpack.c.b16 %v253, %v251
    %v300 = vpack.c.b16 %v254, %v252
    %v301 = vpack.c.b16 %v257, %v255
    %v302 = vpack.c.b16 %v258, %v256
    %v303 = vpack.c.b16 %v261, %v259
    %v304 = vpack.c.b16 %v262, %v260
    %v305 = vpack.c.b16 %v265, %v263
    %v306 = vpack.c.b16 %v266, %v264
    %v307 = vpack.c.b16 %v269, %v267
    %v308 = vpack.c.b16 %v270, %v268
    %v309 = vpack.c.b16 %v273, %v271
    %v310 = vpack.c.b16 %v274, %v272
    %v311 = vpack.c.b16 %v277, %v275
    %v312 = vpack.c.b16 %v278, %v276
    %v313 = vpack.c.b16 %v281, %v279
    %v314 = vpack.c.b16 %v282, %v280
    %347 = vmatpush.bf16.msra.mxu0 %v297
    %348 = vmatpush.bf16.msra.mxu0 %v295
    %349 = vmatpush.bf16.msra.mxu0 %v293
    %350 = vmatpush.bf16.msra.mxu0 %v291
    %351 = vmatpush.bf16.msra.mxu0 %v289
    %352 = vmatpush.bf16.msra.mxu0 %v287
    %353 = vmatpush.bf16.msra.mxu0 %v285
    %354 = vmatpush.bf16.msra.mxu0 %v283
    %355 = vmatmul.bf16.gmra.mxu0 %v143
    %v356 = vpop.f32.mrf.mxu0
    %v357 = vadd.f32 %v183, %v356
    %v358 = vpop.f32.mrf.mxu0
    %v359 = vadd.f32 %v183, %v358
    %360 = vdwg.mxu0
    %361 = vmatpush.bf16.msra.mxu0 %v313
    %362 = vmatpush.bf16.msra.mxu0 %v311
    %363 = vmatpush.bf16.msra.mxu0 %v309
    %364 = vmatpush.bf16.msra.mxu0 %v307
    %365 = vmatpush.bf16.msra.mxu0 %v305
    %366 = vmatpush.bf16.msra.mxu0 %v303
    %367 = vmatpush.bf16.msra.mxu0 %v301
    %368 = vmatpush.bf16.msra.mxu0 %v299
    %369 = vmatmul.bf16.gmra.mxu0 %v147
    %v370 = vpop.f32.mrf.mxu0
    %v371 = vadd.f32 %v357, %v370
    %v372 = vpop.f32.mrf.mxu0
    %v373 = vadd.f32 %v359, %v372
    %374 = vdwg.mxu0
    %375 = vmatpush.bf16.msra.mxu0 %v298
    %376 = vmatpush.bf16.msra.mxu0 %v296
    %377 = vmatpush.bf16.msra.mxu0 %v294
    %378 = vmatpush.bf16.msra.mxu0 %v292
    %379 = vmatpush.bf16.msra.mxu0 %v290
    %380 = vmatpush.bf16.msra.mxu0 %v288
    %381 = vmatpush.bf16.msra.mxu0 %v286
    %382 = vmatpush.bf16.msra.mxu0 %v284
    %383 = vmatmul.bf16.gmra.mxu0 %v143
    %v384 = vpop.f32.mrf.mxu0
    %v385 = vadd.f32 %v184, %v384
    %v386 = vpop.f32.mrf.mxu0
    %v387 = vadd.f32 %v184, %v386
    %388 = vdwg.mxu0
    %389 = vmatpush.bf16.msra.mxu0 %v314
    %390 = vmatpush.bf16.msra.mxu0 %v312
    %391 = vmatpush.bf16.msra.mxu0 %v310
    %392 = vmatpush.bf16.msra.mxu0 %v308
    %393 = vmatpush.bf16.msra.mxu0 %v306
    %394 = vmatpush.bf16.msra.mxu0 %v304
    %395 = vmatpush.bf16.msra.mxu0 %v302
    %396 = vmatpush.bf16.msra.mxu0 %v300
    %397 = vmatmul.bf16.gmra.mxu0 %v147
    %v398 = vpop.f32.mrf.mxu0
    %v399 = vadd.f32 %v385, %v398
    %v400 = vpop.f32.mrf.mxu0
    %v401 = vadd.f32 %v387, %v400
    %402 = vdwg.mxu0
    %v403 = vmax.f32 %v371, 0.0
    %v404 = vmax.f32 %v399, 0.0
    %v405 = vmax.f32 %v373, 0.0
    %v406 = vmax.f32 %v401, 0.0
    %v407 = vld [vmem:[%s3] sm:$0xff]
    %v408 = vld [vmem:[%s3 + $0x8] sm:$0xff]
    %v409 = vmul.f32 %v403, %v407
    %v410 = vmul.f32 %v404, %v408
    %v411 = vmul.f32 %v405, %v407
    %v412 = vmul.f32 %v406, %v408
    %v413 = vrot.slane %v409, 4
    %v414 = vmax.f32 %v409, %v413
    %v415 = vrot.slane %v414, 2
    %v416 = vmax.f32 %v414, %v415
    %v417 = vrot.slane %v416, 1
    %v418 = vmax.f32 %v416, %v417
    %v419 = vrot.slane %v410, 4
    %v420 = vmax.f32 %v410, %v419
    %v421 = vrot.slane %v420, 2
    %v422 = vmax.f32 %v420, %v421
    %v423 = vrot.slane %v422, 1
    %v424 = vmax.f32 %v422, %v423
    %v425 = vrot.slane %v411, 4
    %v426 = vmax.f32 %v411, %v425
    %v427 = vrot.slane %v426, 2
    %v428 = vmax.f32 %v426, %v427
    %v429 = vrot.slane %v428, 1
    %v430 = vmax.f32 %v428, %v429
    %v431 = vrot.slane %v412, 4
    %v432 = vmax.f32 %v412, %v431
    %v433 = vrot.slane %v432, 2
    %v434 = vmax.f32 %v432, %v433
    %v435 = vrot.slane %v434, 1
    %v436 = vmax.f32 %v434, %v435
    %v437 = vld [vmem:[#allocation5] sm:$0xff]
    %v438 = vld [vmem:[#allocation5 + $0x8] sm:$0xff]
    %v439 = vld [vmem:[#allocation5 + $0x10] sm:$0xff]
    %v440 = vld [vmem:[#allocation5 + $0x18] sm:$0xff]
    %v441 = vld [vmem:[#allocation5 + $0x20] sm:$0xff]
    %v442 = vld [vmem:[#allocation5 + $0x28] sm:$0xff]
    %v443 = vld [vmem:[#allocation5 + $0x30] sm:$0xff]
    %v444 = vld [vmem:[#allocation5 + $0x38] sm:$0xff]
    %v445 = vld [vmem:[#allocation5 + $0x40] sm:$0xff]
    %v446 = vld [vmem:[#allocation5 + $0x48] sm:$0xff]
    %v447 = vld [vmem:[#allocation5 + $0x50] sm:$0xff]
    %v448 = vld [vmem:[#allocation5 + $0x58] sm:$0xff]
    %v449 = vld [vmem:[#allocation5 + $0x60] sm:$0xff]
    %v450 = vld [vmem:[#allocation5 + $0x68] sm:$0xff]
    %v451 = vld [vmem:[#allocation5 + $0x70] sm:$0xff]
    %v452 = vld [vmem:[#allocation5 + $0x78] sm:$0xff]
    %v453 = vld [vmem:[#allocation5 + $0x80] sm:$0xff]
    %v454 = vld [vmem:[#allocation5 + $0x88] sm:$0xff]
    %v455 = vld [vmem:[#allocation5 + $0x90] sm:$0xff]
    %v456 = vld [vmem:[#allocation5 + $0x98] sm:$0xff]
    %v457 = vld [vmem:[#allocation5 + $0xa0] sm:$0xff]
    %v458 = vld [vmem:[#allocation5 + $0xa8] sm:$0xff]
    %v459 = vld [vmem:[#allocation5 + $0xb0] sm:$0xff]
    %v460 = vld [vmem:[#allocation5 + $0xb8] sm:$0xff]
    %v461 = vld [vmem:[#allocation5 + $0xc0] sm:$0xff]
    %v462 = vld [vmem:[#allocation5 + $0xc8] sm:$0xff]
    %v463 = vld [vmem:[#allocation5 + $0xd0] sm:$0xff]
    %v464 = vld [vmem:[#allocation5 + $0xd8] sm:$0xff]
    %v465 = vld [vmem:[#allocation5 + $0xe0] sm:$0xff]
    %v466 = vld [vmem:[#allocation5 + $0xe8] sm:$0xff]
    %v467 = vld [vmem:[#allocation5 + $0xf0] sm:$0xff]
    %v468 = vld [vmem:[#allocation5 + $0xf8] sm:$0xff]
    %v469 = vld [vmem:[%s5] sm:$0x1]
    %v471 = vperm.slane %v469, 0
    %vm477 = vcmask 1041409
    %v478 = vsel %vm477, %v430, %v418
    %v479 = vsel %vm477, %v436, %v424
    %482 = vmatpush.msra.mxu0 %v452
    %483 = vmatpush.msra.mxu0 %v451
    %484 = vmatpush.msra.mxu0 %v450
    %485 = vmatpush.msra.mxu0 %v449
    %486 = vmatpush.msra.mxu0 %v448
    %487 = vmatpush.msra.mxu0 %v447
    %488 = vmatpush.msra.mxu0 %v446
    %489 = vmatpush.msra.mxu0 %v445
    %490 = vmatpush.msra.mxu0 %v444
    %491 = vmatpush.msra.mxu0 %v443
    %492 = vmatpush.msra.mxu0 %v442
    %493 = vmatpush.msra.mxu0 %v441
    %494 = vmatpush.msra.mxu0 %v440
    %495 = vmatpush.msra.mxu0 %v439
    %496 = vmatpush.msra.mxu0 %v438
    %497 = vmatpush.msra.mxu0 %v437
    %498 = vmatmul.f32.gmra.mxu0 %v478
    %v499 = vpop.f32.mrf.mxu0
    %v500 = vadd.f32 %v471, %v499
    %501 = vdwg.mxu0
    %502 = vmatpush.msra.mxu0 %v468
    %503 = vmatpush.msra.mxu0 %v467
    %504 = vmatpush.msra.mxu0 %v466
    %505 = vmatpush.msra.mxu0 %v465
    %506 = vmatpush.msra.mxu0 %v464
    %507 = vmatpush.msra.mxu0 %v463
    %508 = vmatpush.msra.mxu0 %v462
    %509 = vmatpush.msra.mxu0 %v461
    %510 = vmatpush.msra.mxu0 %v460
    %511 = vmatpush.msra.mxu0 %v459
    %512 = vmatpush.msra.mxu0 %v458
    %513 = vmatpush.msra.mxu0 %v457
    %514 = vmatpush.msra.mxu0 %v456
    %515 = vmatpush.msra.mxu0 %v455
    %516 = vmatpush.msra.mxu0 %v454
    %517 = vmatpush.msra.mxu0 %v453
    %518 = vmatmul.f32.gmra.mxu0 %v479
    %v519 = vpop.f32.mrf.mxu0
    %v520 = vadd.f32 %v500, %v519
    %521 = vdwg.mxu0
    %522 = vst [vmem:[#allocation7] sm:$0x3] %v520
    // Predicated region
    $region34: #{tpu_custom_call.1} parent=1 // pred_check
      _
    $region35: #{tpu_custom_call.1} parent=1 // pred_check_branch
      %524 = sbr.rel (0) target = $region37
    $region36: #{tpu_custom_call.1} parent=1 // pred_region
      %526 = vsyncadd [#allocation4], 0
      %s528 = sshll.u32 [#allocation7], 4
      %s529 = int_to_ptr.vmem [resolvable:$true] %s528
      %s530 = sshll.u32 %s6, 4
      %s531 = int_to_ptr.hbm [resolvable:$true] %s530
      %533 = dma.vmem_to_hbm [thread:$0]  %s529, 32, %s531, [#allocation4]
    $region37: #{tpu_custom_call.1} parent=1 // pred_fallthru
      _
    // Predicated region
    $region38: #{tpu_custom_call.1} parent=1 // pred_check
      _
    $region39: #{tpu_custom_call.1} parent=1 // pred_check_branch
      %535 = sbr.rel (0) target = $region41
    $region40: #{tpu_custom_call.1} parent=1 // pred_region
      %537 = dma.done [#allocation4], 32
    $region41: #{tpu_custom_call.1} parent=1 // pred_fallthru
      _
    %538 = vsyncpa [#allocation3], 1
    %539 = vsyncpa [#allocation6], 1
    %540 = vsyncpa [#allocation4], 1

</llo_original>
